<compile_context>
chip_gen: v6e
topology: v6e:2x2x1
jax: 0.10.0
libtpu: 0.0.40
codegen_flags: <defaults>
</compile_context>

<pallas_src>
import functools
import math

import jax
import jax.numpy as jnp
from jax.experimental import pallas as pl
from jax.experimental.pallas import tpu as pltpu


def _round_up(x, m):
    return ((x + m - 1) // m) * m


def _fused_mlp_kernel(kv_ref, x_ref, w_ref, b_ref, o_ref, act_ref, acc_ref,
                      *, num_layers, nk, nk_in, tk, o_w):
    """One grid step = (batch tile i, layer l, K chunk k).

    kv_ref : SMEM (L,) int32  -- number of valid K chunks per layer
    x_ref  : (tm, x_w)        -- padded input tile (compute dtype)
    w_ref  : (1, tk, d_pad)   -- K-slice of layer l's padded weight (in, out)
    b_ref  : (1, 1, d_pad)    -- layer l's padded bias (f32)
    o_ref  : (tm, o_w)        -- padded output tile
    act_ref: (nk, tm, tk)     -- VMEM-resident activation, chunked along K
    acc_ref: (tm, d_pad) f32  -- accumulator for the current layer
    """
    l = pl.program_id(1)
    k = pl.program_id(2)

    # First step for this batch tile: stage x into the resident activation.
    @pl.when(jnp.logical_and(l == 0, k == 0))
    def _load_input():
        for kk in range(nk_in):
            act_ref[kk] = x_ref[:, kk * tk:(kk + 1) * tk]

    # Chunk 0 is always valid: assign (removes a full-width zero-fill pass).
    @pl.when(k == 0)
    def _first_chunk():
        acc_ref[...] = jnp.dot(act_ref[0], w_ref[0],
                               preferred_element_type=jnp.float32)

    # Later chunks: accumulate only while inside this layer's real input
    # width -> padded all-zero K tiles are never multiplied on the MXU.
    @pl.when(jnp.logical_and(k > 0, k < kv_ref[l]))
    def _accum_chunk():
        acc_ref[...] += jnp.dot(act_ref[k], w_ref[0],
                                preferred_element_type=jnp.float32)

    # Hidden-layer epilogue: bias + ReLU, re-chunk into the resident
    # activation.  Per (tm, tk) chunk so the live temporary stays small.
    @pl.when(jnp.logical_and(k == nk - 1, l < num_layers - 1))
    def _epilogue():
        for kk in range(nk):
            sl = slice(kk * tk, (kk + 1) * tk)
            y = jnp.maximum(acc_ref[:, sl] + b_ref[0, :, sl], 0.0)
            act_ref[kk] = y.astype(act_ref.dtype)

    # Last layer: write only the lane-dense real output width.
    @pl.when(jnp.logical_and(k == nk - 1, l == num_layers - 1))
    def _store_out():
        o_ref[...] = jnp.maximum(acc_ref[:, :o_w] + b_ref[0, :, :o_w],
                                 0.0).astype(o_ref.dtype)


def mlp_forward(params, x, *, compute_dtype=jnp.bfloat16):
    """Fused MLP forward: y = relu(... relu(x @ W0 + b0) ... @ WL + bL)."""
    B, d_in = x.shape
    num_layers = len(params)
    out_sizes = [w.shape[1] for w, _ in params]
    in_sizes = [d_in] + out_sizes[:-1]
    d_out = out_sizes[-1]
    all_sizes = [d_in] + out_sizes

    # Shared padded feature width: multiple of 128 covering every layer.
    d_pad = max(128, _round_up(max(all_sizes), 128))

    # K tile: a 128-multiple divisor of d_pad (<= 512) -> never truncates.
    tk = 128
    for cand in (512, 384, 256, 128):
        if d_pad % cand == 0:
            tk = cand
            break
    nk = d_pad // tk
    assert nk * tk == d_pad

    # Batch tile.  Large tm amortizes the per-batch-tile weight re-stream;
    # if it leaves a single tile, split once so a v7x megacore can use both
    # TensorCores on the "parallel" grid axis.
    tm = min(512, _round_up(B, 8))
    if _round_up(B, tm) // tm < 2 and tm >= 16:
        tm = max(8, _round_up(tm // 2, 8))
    b_pad = _round_up(B, tm)
    n_btiles = b_pad // tm

    # Input / output blocks use their own padded widths (not d_pad).
    x_w = _round_up(d_in, tk)          # multiple of tk (and 128), <= d_pad
    o_w = _round_up(d_out, 128)
    nk_in = x_w // tk

    comp_isz = jnp.dtype(compute_dtype).itemsize
    out_dtype = x.dtype
    out_isz = jnp.dtype(out_dtype).itemsize

    # Per-layer valid K-chunk counts (scalar-prefetched into SMEM).
    kv_py = [-(-s // tk) for s in in_sizes]
    kv = jnp.asarray(kv_py, dtype=jnp.int32)

    # Zero-pad & stack weights ((in, out) layout) and biases.  Padding is
    # exact: padded in-features hit zero rows, padded out-features get zero
    # cols + zero bias -> relu(0) == 0.
    w_stack = jnp.stack([
        jnp.pad(w.astype(jnp.float32),
                ((0, d_pad - w.shape[0]), (0, d_pad - w.shape[1])))
        for w, _ in params]).astype(compute_dtype)
    b_stack = jnp.stack([
        jnp.pad(b.astype(jnp.float32), (0, d_pad - b.shape[0])).reshape(1, d_pad)
        for _, b in params])
    x_pad = jnp.pad(x, ((0, b_pad - B), (0, x_w - d_in))).astype(compute_dtype)

    grid = (n_btiles, num_layers, nk)

    # Honest scheduler hint: real (valid-K) flops; weights are re-streamed
    # once per batch tile.
    layer_k_elems = sum(kv_py[l] * tk * d_pad for l in range(num_layers))
    flops = 2 * b_pad * layer_k_elems
    bytes_accessed = (x_pad.size * comp_isz
                      + n_btiles * layer_k_elems * comp_isz
                      + n_btiles * b_stack.size * 4
                      + b_pad * o_w * out_isz)

    # VMEM budget: double-buffered blocks + resident scratch, capped by the
    # actual device capacity (v7x has 64 MiB/TC, v5e/v6e 128 MiB).
    vmem_need = (2 * tm * x_w * comp_isz          # x block
                 + 2 * tk * d_pad * comp_isz      # weight K-slice
                 + 2 * d_pad * 4                  # bias
                 + 2 * tm * o_w * out_isz         # out block
                 + tm * d_pad * comp_isz          # resident activation
                 + tm * d_pad * 4)                # f32 accumulator
    try:
        vmem_cap = int(pltpu.get_tpu_info().vmem_capacity_bytes)
    except Exception:
        vmem_cap = 64 << 20
    vmem_limit = min(max(int(vmem_need * 3 // 2), 32 << 20),
                     int(vmem_cap * 85 // 100))

    kernel = functools.partial(_fused_mlp_kernel, num_layers=num_layers,
                               nk=nk, nk_in=nk_in, tk=tk, o_w=o_w)

    out_pad = pl.pallas_call(
        kernel,
        out_shape=jax.ShapeDtypeStruct((b_pad, o_w), out_dtype),
        grid_spec=pltpu.PrefetchScalarGridSpec(
            num_scalar_prefetch=1,
            grid=grid,
            in_specs=[
                # x: only re-DMAed when the batch tile changes.
                pl.BlockSpec((tm, x_w), lambda i, l, k, kvr: (i, 0)),
                # weights: clamp skipped K chunks to the last valid one so
                # the all-zero padded slices are never streamed from HBM.
                pl.BlockSpec((1, tk, d_pad),
                             lambda i, l, k, kvr:
                                 (l, jnp.minimum(k, kvr[l] - 1), 0)),
                pl.BlockSpec((1, 1, d_pad), lambda i, l, k, kvr: (l, 0, 0)),
            ],
            out_specs=pl.BlockSpec((tm, o_w), lambda i, l, k, kvr: (i, 0)),
            scratch_shapes=[
                pltpu.VMEM((nk, tm, tk), compute_dtype),  # resident activation
                pltpu.VMEM((tm, d_pad), jnp.float32),     # f32 accumulator
            ],
        ),
        compiler_params=pltpu.CompilerParams(
            dimension_semantics=("parallel", "arbitrary", "arbitrary"),
            vmem_limit_bytes=vmem_limit,
        ),
        cost_estimate=pl.CostEstimate(
            flops=flops, transcendentals=0, bytes_accessed=bytes_accessed),
    )(kv, x_pad, w_stack, b_stack)

    return out_pad[:B, :d_out]


def init_mlp_params(key, layer_sizes):
    """Matches weights_init: xavier_uniform(gain=0.5) on weight, bias = 0."""
    params = []
    gain = 0.5
    for i in range(len(layer_sizes) - 1):
        fan_in, fan_out = layer_sizes[i], layer_sizes[i + 1]
        key, sub = jax.random.split(key)
        bound = gain * math.sqrt(6.0 / (fan_in + fan_out))
        # PyTorch weight is (out, in); store transposed (in, out) for x @ W.
        w = jax.random.uniform(sub, (fan_in, fan_out),
                               minval=-bound, maxval=bound, dtype=jnp.float32)
        b = jnp.zeros((fan_out,), dtype=jnp.float32)
        params.append((w, b))
    return params


if __name__ == "__main__":
    key = jax.random.PRNGKey(0)
    layer_sizes = [32, 64, 16]
    batch = 8

    pkey, xkey = jax.random.split(key)
    params = init_mlp_params(pkey, layer_sizes)
    x = jax.random.normal(xkey, (batch, layer_sizes[0]), dtype=jnp.float32)

    # Plain-JAX reference (ReLU after EVERY Linear, matching nn.Sequential).
    ref = x
    for w, b in params:
        ref = jnp.maximum(ref @ w + b, 0.0)

    # Exactness check with f32 operands.
    out_f32 = jax.block_until_ready(
        jax.jit(lambda p, xx: mlp_forward(p, xx, compute_dtype=jnp.float32))(
            params, x))
    assert out_f32.shape == (batch, layer_sizes[-1])
    assert jnp.allclose(out_f32, ref, atol=1e-5, rtol=1e-5)

    # Default bf16-operand path (MXU-native); looser tolerance vs f32 ref.
    out_bf16 = jax.block_until_ready(jax.jit(mlp_forward)(params, x))
    assert out_bf16.shape == (batch, layer_sizes[-1])
    assert jnp.allclose(out_bf16, ref, atol=3e-2, rtol=3e-2)

    print("KERNEL_OK")
</pallas_src>

<mosaic_0001>
module attributes {stable_mosaic.version = 11 : i64} {
  func.func @_fused_mlp_kernel(%arg0: i32, %arg1: i32, %arg2: i32, %arg3: memref<2xi32, #tpu.memory_space<smem>>, %arg4: memref<8x128xf32, #tpu.memory_space<vmem>>, %arg5: memref<1x128x128xf32, #tpu.memory_space<vmem>>, %arg6: memref<1x1x128xf32, #tpu.memory_space<vmem>>, %arg7: memref<8x128xf32, #tpu.memory_space<vmem>>, %arg8: memref<1x8x128xf32, #tpu.memory_space<vmem>>, %arg9: memref<8x128xf32, #tpu.memory_space<vmem>>) attributes {dimension_semantics = [#tpu.dimension_semantics<parallel>, #tpu.dimension_semantics<arbitrary>, #tpu.dimension_semantics<arbitrary>], iteration_bounds = array<i64: 1, 2, 1>, scalar_prefetch = 1 : i64, scratch_operands = 2 : i64, tpu.core_type = #tpu.core_type<tc>, window_params = [{transform_indices = @transform_0, window_bounds = array<i64: 8, 128>}, {transform_indices = @transform_1, window_bounds = array<i64: 1, 128, 128>}, {transform_indices = @transform_2, window_bounds = array<i64: 1, 1, 128>}, {transform_indices = @transform_3, window_bounds = array<i64: 8, 128>}]} {
    %c0_i32 = arith.constant 0 : i32
    %0 = arith.cmpi eq, %arg1, %c0_i32 : i32
    %c0_i32_0 = arith.constant 0 : i32
    %1 = arith.cmpi eq, %arg2, %c0_i32_0 : i32
    %2 = arith.andi %0, %1 : i1
    %3 = arith.extui %2 : i1 to i32
    %c0_i32_1 = arith.constant 0 : i32
    %4 = arith.cmpi ne, %3, %c0_i32_1 : i32
    scf.if %4 {
      %c0 = arith.constant 0 : index
      %c0_11 = arith.constant 0 : index
      %25 = vector.load %arg4[%c0, %c0_11] : memref<8x128xf32, #tpu.memory_space<vmem>>, vector<8x128xf32>
      %c0_12 = arith.constant 0 : index
      %c0_13 = arith.constant 0 : index
      %c0_14 = arith.constant 0 : index
      %26 = vector.load %arg8[%c0_12, %c0_13, %c0_14] : memref<1x8x128xf32, #tpu.memory_space<vmem>>, vector<1x8x128xf32>
      %27 = vector.shape_cast %26 : vector<1x8x128xf32> to vector<8x128xf32>
      %28 = vector.shape_cast %25 : vector<8x128xf32> to vector<1x8x128xf32>
      tpu.vector_store %arg8[%c0_12, %c0_13, %c0_14], %28 {strides = array<i32>} : memref<1x8x128xf32, #tpu.memory_space<vmem>>, vector<1x8x128xf32>,
    } else {
    }
    %c0_i32_2 = arith.constant 0 : i32
    %5 = arith.cmpi eq, %arg2, %c0_i32_2 : i32
    %6 = arith.extui %5 : i1 to i32
    %c0_i32_3 = arith.constant 0 : i32
    %7 = arith.cmpi ne, %6, %c0_i32_3 : i32
    scf.if %7 {
      %c0 = arith.constant 0 : index
      %c0_11 = arith.constant 0 : index
      %c0_12 = arith.constant 0 : index
      %25 = vector.load %arg8[%c0, %c0_11, %c0_12] : memref<1x8x128xf32, #tpu.memory_space<vmem>>, vector<1x8x128xf32>
      %26 = vector.shape_cast %25 : vector<1x8x128xf32> to vector<8x128xf32>
      %c0_13 = arith.constant 0 : index
      %c0_14 = arith.constant 0 : index
      %c0_15 = arith.constant 0 : index
      %27 = vector.load %arg5[%c0_13, %c0_14, %c0_15] : memref<1x128x128xf32, #tpu.memory_space<vmem>>, vector<1x128x128xf32>
      %28 = vector.shape_cast %27 : vector<1x128x128xf32> to vector<128x128xf32>
      %cst = arith.constant dense<0.000000e+00> : vector<8x128xf32>
      %29 = tpu.matmul %26, %28, %cst {dimension_numbers = #tpu.dot_dimension_numbers<[1], [0], [0], [1], [0, 0, 1, 1], [], []>} : vector<8x128xf32>, vector<128x128xf32>, vector<8x128xf32> -> vector<8x128xf32>
      %c0_16 = arith.constant 0 : index
      %c0_17 = arith.constant 0 : index
      %30 = vector.load %arg9[%c0_16, %c0_17] : memref<8x128xf32, #tpu.memory_space<vmem>>, vector<8x128xf32>
      tpu.vector_store %arg9[%c0_16, %c0_17], %29 {strides = array<i32>} : memref<8x128xf32, #tpu.memory_space<vmem>>, vector<8x128xf32>,
    } else {
    }
    %c0_i32_4 = arith.constant 0 : i32
    %8 = arith.cmpi sgt, %arg2, %c0_i32_4 : i32
    %9 = arith.index_cast %arg1 : i32 to index
    %10 = memref.load %arg3[%9] : memref<2xi32, #tpu.memory_space<smem>>
    %11 = arith.cmpi slt, %arg2, %10 : i32
    %12 = arith.andi %8, %11 : i1
    %13 = arith.extui %12 : i1 to i32
    %c0_i32_5 = arith.constant 0 : i32
    %14 = arith.cmpi ne, %13, %c0_i32_5 : i32
    scf.if %14 {
      %c0 = arith.constant 0 : index
      %c0_11 = arith.constant 0 : index
      %25 = vector.load %arg9[%c0, %c0_11] : memref<8x128xf32, #tpu.memory_space<vmem>>, vector<8x128xf32>
      %26 = arith.index_cast %arg2 : i32 to index
      %c0_12 = arith.constant 0 : index
      %c0_13 = arith.constant 0 : index
      %27 = vector.load %arg8[%26, %c0_12, %c0_13] : memref<1x8x128xf32, #tpu.memory_space<vmem>>, vector<1x8x128xf32>
      %28 = vector.shape_cast %27 : vector<1x8x128xf32> to vector<8x128xf32>
      %c0_14 = arith.constant 0 : index
      %c0_15 = arith.constant 0 : index
      %c0_16 = arith.constant 0 : index
      %29 = vector.load %arg5[%c0_14, %c0_15, %c0_16] : memref<1x128x128xf32, #tpu.memory_space<vmem>>, vector<1x128x128xf32>
      %30 = vector.shape_cast %29 : vector<1x128x128xf32> to vector<128x128xf32>
      %cst = arith.constant dense<0.000000e+00> : vector<8x128xf32>
      %31 = tpu.matmul %28, %30, %cst {dimension_numbers = #tpu.dot_dimension_numbers<[1], [0], [0], [1], [0, 0, 1, 1], [], []>} : vector<8x128xf32>, vector<128x128xf32>, vector<8x128xf32> -> vector<8x128xf32>
      %32 = arith.addf %25, %31 : vector<8x128xf32>
      %c0_17 = arith.constant 0 : index
      %c0_18 = arith.constant 0 : index
      %33 = vector.load %arg9[%c0_17, %c0_18] : memref<8x128xf32, #tpu.memory_space<vmem>>, vector<8x128xf32>
      tpu.vector_store %arg9[%c0_17, %c0_18], %32 {strides = array<i32>} : memref<8x128xf32, #tpu.memory_space<vmem>>, vector<8x128xf32>,
    } else {
    }
    %c0_i32_6 = arith.constant 0 : i32
    %15 = arith.cmpi eq, %arg2, %c0_i32_6 : i32
    %c1_i32 = arith.constant 1 : i32
    %16 = arith.cmpi slt, %arg1, %c1_i32 : i32
    %17 = arith.andi %15, %16 : i1
    %18 = arith.extui %17 : i1 to i32
    %c0_i32_7 = arith.constant 0 : i32
    %19 = arith.cmpi ne, %18, %c0_i32_7 : i32
    scf.if %19 {
      %c0 = arith.constant 0 : index
      %c0_11 = arith.constant 0 : index
      %25 = vector.load %arg9[%c0, %c0_11] : memref<8x128xf32, #tpu.memory_space<vmem>>, vector<8x128xf32>
      %c0_12 = arith.constant 0 : index
      %c0_13 = arith.constant 0 : index
      %c0_14 = arith.constant 0 : index
      %26 = vector.load %arg6[%c0_12, %c0_13, %c0_14] : memref<1x1x128xf32, #tpu.memory_space<vmem>>, vector<1x1x128xf32>
      %27 = vector.shape_cast %26 : vector<1x1x128xf32> to vector<1x128xf32>
      %28 = vector.broadcast %27 : vector<1x128xf32> to vector<8x128xf32>
      %29 = arith.addf %25, %28 : vector<8x128xf32>
      %cst = arith.constant 0.000000e+00 : f32
      %30 = vector.broadcast %cst : f32 to vector<8x128xf32>
      %31 = arith.maximumf %29, %30 : vector<8x128xf32>
      %c0_15 = arith.constant 0 : index
      %c0_16 = arith.constant 0 : index
      %c0_17 = arith.constant 0 : index
      %32 = vector.load %arg8[%c0_15, %c0_16, %c0_17] : memref<1x8x128xf32, #tpu.memory_space<vmem>>, vector<1x8x128xf32>
      %33 = vector.shape_cast %32 : vector<1x8x128xf32> to vector<8x128xf32>
      %34 = vector.shape_cast %31 : vector<8x128xf32> to vector<1x8x128xf32>
      tpu.vector_store %arg8[%c0_15, %c0_16, %c0_17], %34 {strides = array<i32>} : memref<1x8x128xf32, #tpu.memory_space<vmem>>, vector<1x8x128xf32>,
    } else {
    }
    %c0_i32_8 = arith.constant 0 : i32
    %20 = arith.cmpi eq, %arg2, %c0_i32_8 : i32
    %c1_i32_9 = arith.constant 1 : i32
    %21 = arith.cmpi eq, %arg1, %c1_i32_9 : i32
    %22 = arith.andi %20, %21 : i1
    %23 = arith.extui %22 : i1 to i32
    %c0_i32_10 = arith.constant 0 : i32
    %24 = arith.cmpi ne, %23, %c0_i32_10 : i32
    scf.if %24 {
      %c0 = arith.constant 0 : index
      %c0_11 = arith.constant 0 : index
      %25 = vector.load %arg9[%c0, %c0_11] : memref<8x128xf32, #tpu.memory_space<vmem>>, vector<8x128xf32>
      %c0_12 = arith.constant 0 : index
      %c0_13 = arith.constant 0 : index
      %c0_14 = arith.constant 0 : index
      %26 = vector.load %arg6[%c0_12, %c0_13, %c0_14] : memref<1x1x128xf32, #tpu.memory_space<vmem>>, vector<1x1x128xf32>
      %27 = vector.shape_cast %26 : vector<1x1x128xf32> to vector<1x128xf32>
      %28 = vector.broadcast %27 : vector<1x128xf32> to vector<8x128xf32>
      %29 = arith.addf %25, %28 : vector<8x128xf32>
      %cst = arith.constant 0.000000e+00 : f32
      %30 = vector.broadcast %cst : f32 to vector<8x128xf32>
      %31 = arith.maximumf %29, %30 : vector<8x128xf32>
      %c0_15 = arith.constant 0 : index
      %c0_16 = arith.constant 0 : index
      %32 = vector.load %arg7[%c0_15, %c0_16] : memref<8x128xf32, #tpu.memory_space<vmem>>, vector<8x128xf32>
      tpu.vector_store %arg7[%c0_15, %c0_16], %31 {strides = array<i32>} : memref<8x128xf32, #tpu.memory_space<vmem>>, vector<8x128xf32>,
    } else {
    }
    return
  }
  func.func @transform_0(%arg0: i32, %arg1: i32, %arg2: i32, %arg3: memref<2xi32, #tpu.memory_space<smem>>) -> (i32, i32) {
    %c0_i32 = arith.constant 0 : i32
    %c0_i32_0 = arith.constant 0 : i32
    return %arg0, %c0_i32 : i32, i32
  }
  func.func @transform_1(%arg0: i32, %arg1: i32, %arg2: i32, %arg3: memref<2xi32, #tpu.memory_space<smem>>) -> (i32, i32, i32) {
    %0 = arith.index_cast %arg1 : i32 to index
    %1 = memref.load %arg3[%0] : memref<2xi32, #tpu.memory_space<smem>>
    %c1_i32 = arith.constant 1 : i32
    %2 = arith.subi %1, %c1_i32 : i32
    %3 = arith.minsi %arg2, %2 : i32
    %c0_i32 = arith.constant 0 : i32
    %c0_i32_0 = arith.constant 0 : i32
    return %arg1, %3, %c0_i32 : i32, i32, i32
  }
  func.func @transform_2(%arg0: i32, %arg1: i32, %arg2: i32, %arg3: memref<2xi32, #tpu.memory_space<smem>>) -> (i32, i32, i32) {
    %c0_i32 = arith.constant 0 : i32
    %c0_i32_0 = arith.constant 0 : i32
    %c0_i32_1 = arith.constant 0 : i32
    return %arg1, %c0_i32, %c0_i32_0 : i32, i32, i32
  }
  func.func @transform_3(%arg0: i32, %arg1: i32, %arg2: i32, %arg3: memref<2xi32, #tpu.memory_space<smem>>) -> (i32, i32) {
    %c0_i32 = arith.constant 0 : i32
    %c0_i32_0 = arith.constant 0 : i32
    return %arg0, %c0_i32 : i32, i32
  }
}

</mosaic_0001>

<llo_original>
// kernel: _lambda_.1
$region0: #{_lambda_.1}
  #allocation0 [shape = 'u32[]', space=smem, size = 0x4, offset = 0x4, fixed_abs, tag = 'smem constant byte address 0x4 - core index']
  #allocation1 [shape = 'u32[144,128]{1,0:T(1,128)}', space=vmem, size = 0x12000, scoped, tag = 'internal scratch']
  #allocation2 [shape = 'f32[1,8,128]{2,1,0:T(8,128)}', space=vmem, size = 0x1000, scoped, tag = 'scratch operand']
  #allocation3 [shape = 'f32[8,128]{1,0:T(8,128)}', space=vmem, size = 0x1000, scoped, tag = 'scratch operand']
  #allocation4 [shape = 's32[1]{0}', space=sflag, size = 0x4, scoped, tag = 'scoped memory for _lambda_.1']
  #allocation5 [shape = 'u8[512]{0}', space=smem, size = 0x200, scoped, tag = 'prefetched SMEM operand 0']
  %s0 = inlined_call_operand.vmem [shape: s32[2], index: 0, kind: input, shape index: {}]
  %s1 = inlined_call_operand.vmem [shape: f32[8,128], index: 1, kind: input, shape index: {}]
  %s2 = inlined_call_operand.vmem [shape: f32[2,128,128], index: 2, kind: input, shape index: {}]
  %s3 = inlined_call_operand.vmem [shape: f32[2,1,128], index: 3, kind: input, shape index: {}]
  %s4 = inlined_call_operand.hbm [shape: f32[8,128], index: 4, kind: output, shape index: {}]
  %s5 = sld [smem:[#allocation0]]
  $region65: #{_lambda_.1} parent=0
    _
  %s7 = ssub.s32 1, %s5
  %s8 = scalar_select 0, %s7, %s5
  %s9 = sshll.u32 %s0, 4
  %s10 = int_to_ptr.vmem [resolvable:$true] %s9
  %12 = dma.vmem_to_smem %s10, 16, [#allocation5], [#allocation4]
  %13 = dma.done [#allocation4], 16
  %14 = sfence
  $region1: #{_lambda_.1} parent=0
    #allocation6 [shape = 'u8[4096]{0}', space=vmem, size = 0x1000, scoped, tag = 'output window, operand 0, single buffered']
    #allocation7 [shape = 's32[2]{0}', space=sflag, size = 0x8, scoped, tag = 'scoped memory for _lambda_.1']
    %15 = vsyncpa [#allocation7], 0
    loop: start=0, step=1, limit=4
    $region2: #{_lambda_.1} parent=1 // loop_pre_header
      _
    $region3: #{_lambda_.1} parent=1 // loop_header
      %s17 = sphi 0, %s21
      %p18 = scmp.ge.s32.totalorder %s17, 4
      %s24 = sphi 0, %s43
      %s25 = sphi 0, %s39
      %s26 = sphi 0, %s35
      %s27 = sphi 0, %s24
      %s28 = sphi 0, %s25
      %s29 = sphi 0, %s26
      %s30 = sphi 0, %s27
      %s31 = sphi 0, %s28
      %s32 = sphi 0, %s29
      %s46 = sphi 0, %s48
      %s49 = sphi 0, %s46
      %s50 = sphi 0, %s49
      %s66 = sphi 0, %s50
      %s82 = sphi 0, %s84
      %s85 = sphi 0, %s82
      %s86 = sphi 0, %s85
      %s102 = sphi 0, %s86
      %s108 = sphi 0, %s110
      %s111 = sphi 0, %s108
      %s112 = sphi 0, %s111
      %s128 = sphi 0, %s112
      %s134 = sphi 0, %s136
      %s137 = sphi 0, %s134
      %s138 = sphi 0, %s137
      %s154 = sphi 0, %s138
    $region4: #{_lambda_.1} parent=1 // loop_header_branch
      %20 = sbr.rel (%p18) target = $region8
    $region5: #{_lambda_.1} parent=1 // loop_body
      %s22 = ssub.s32 %s17, 1
      %s23 = ssub.s32 %s17, 2
      %s33 = sadd.s32 1, %s26
      %p34 = scmp.ge.s32.totalorder %s33, 1
      %s35 = scalar_select %p34, 0, %s33
      %s36 = sadd.s32 1, %s25
      %s37 = scalar_select %p34, %s36, %s25
      %p38 = scmp.ge.s32.totalorder %s37, 2
      %s39 = scalar_select %p38, 0, %s37
      %s40 = sadd.s32 1, %s24
      %s41 = scalar_select %p38, %s40, %s24
      %p42 = scmp.ge.s32.totalorder %s41, 1
      %s43 = scalar_select %p42, 0, %s41
      %s44 = ssub.s32 %s24, %s43
      %p45 = scmp.eq.s32.totalorder %s44, 0
      %s47 = sadd.s32 %s46, 1
      %s48 = scalar_select %p45, %s46, %s47
      %p51 = pneg %p45
      %p52 = scmp.eq.s32.totalorder %s17, 1
      %p53 = por %p51, %p52
      %p54 = scmp.ne.s32.totalorder %s46, %s49
      %p55 = scmp.eq.s32.totalorder %s17, 0
      %p56 = por %p54, %p55
      %p57 = scmp.ne.s32.totalorder %s46, %s49
      %p58 = scmp.eq.s32.totalorder %s22, 1
      %p59 = por %p57, %p58
      %p60 = scmp.ne.s32.totalorder %s49, %s50
      %p61 = scmp.eq.s32.totalorder %s22, 0
      %p62 = por %p60, %p61
      %p63 = scmp.ne.s32.totalorder %s49, %s50
      %p64 = scmp.eq.s32.totalorder %s23, 1
      %p65 = por %p63, %p64
      %p67 = scmp.ne.s32.totalorder %s50, %s66
      %p68 = scmp.eq.s32.totalorder %s23, 0
      %p69 = por %p67, %p68
      %s70 = sld [smem:[#allocation5 + %s25]]
      %s71 = ssub.s32 %s70, 1
      %p72 = scmp.lt.s32.totalorder %s26, %s71
      %s73 = scalar_select %p72, %s26, %s71
      %s74 = sld [smem:[#allocation5 + %s39]]
      %s75 = ssub.s32 %s74, 1
      %p76 = scmp.lt.s32.totalorder %s35, %s75
      %s77 = scalar_select %p76, %s35, %s75
      %s78 = ssub.s32 %s25, %s39
      %s79 = ssub.s32 %s73, %s77
      %s80 = sor.u32 %s78, %s79
      %p81 = scmp.eq.s32.totalorder %s80, 0
      %s83 = sadd.s32 %s82, 1
      %s84 = scalar_select %p81, %s82, %s83
      %p87 = pneg %p81
      %p88 = scmp.eq.s32.totalorder %s17, 1
      %p89 = por %p87, %p88
      %p90 = scmp.ne.s32.totalorder %s82, %s85
      %p91 = scmp.eq.s32.totalorder %s17, 0
      %p92 = por %p90, %p91
      %p93 = scmp.ne.s32.totalorder %s82, %s85
      %p94 = scmp.eq.s32.totalorder %s22, 1
      %p95 = por %p93, %p94
      %p96 = scmp.ne.s32.totalorder %s85, %s86
      %p97 = scmp.eq.s32.totalorder %s22, 0
      %p98 = por %p96, %p97
      %p99 = scmp.ne.s32.totalorder %s85, %s86
      %p100 = scmp.eq.s32.totalorder %s23, 1
      %p101 = por %p99, %p100
      %p103 = scmp.ne.s32.totalorder %s86, %s102
      %p104 = scmp.eq.s32.totalorder %s23, 0
      %p105 = por %p103, %p104
      %s106 = ssub.s32 %s25, %s39
      %p107 = scmp.eq.s32.totalorder %s106, 0
      %s109 = sadd.s32 %s108, 1
      %s110 = scalar_select %p107, %s108, %s109
      %p113 = pneg %p107
      %p114 = scmp.eq.s32.totalorder %s17, 1
      %p115 = por %p113, %p114
      %p116 = scmp.ne.s32.totalorder %s108, %s111
      %p117 = scmp.eq.s32.totalorder %s17, 0
      %p118 = por %p116, %p117
      %p119 = scmp.ne.s32.totalorder %s108, %s111
      %p120 = scmp.eq.s32.totalorder %s22, 1
      %p121 = por %p119, %p120
      %p122 = scmp.ne.s32.totalorder %s111, %s112
      %p123 = scmp.eq.s32.totalorder %s22, 0
      %p124 = por %p122, %p123
      %p125 = scmp.ne.s32.totalorder %s111, %s112
      %p126 = scmp.eq.s32.totalorder %s23, 1
      %p127 = por %p125, %p126
      %p129 = scmp.ne.s32.totalorder %s112, %s128
      %p130 = scmp.eq.s32.totalorder %s23, 0
      %p131 = por %p129, %p130
      %s132 = ssub.s32 %s24, %s43
      %p133 = scmp.eq.s32.totalorder %s132, 0
      %s135 = sadd.s32 %s134, 1
      %s136 = scalar_select %p133, %s134, %s135
      %p139 = pneg %p133
      %p140 = scmp.eq.s32.totalorder %s17, 1
      %p141 = por %p139, %p140
      %p142 = scmp.ne.s32.totalorder %s134, %s137
      %p143 = scmp.eq.s32.totalorder %s17, 0
      %p144 = por %p142, %p143
      %p145 = scmp.ne.s32.totalorder %s134, %s137
      %p146 = scmp.eq.s32.totalorder %s22, 1
      %p147 = por %p145, %p146
      %p148 = scmp.ne.s32.totalorder %s137, %s138
      %p149 = scmp.eq.s32.totalorder %s22, 0
      %p150 = por %p148, %p149
      %p151 = scmp.ne.s32.totalorder %s137, %s138
      %p152 = scmp.eq.s32.totalorder %s23, 1
      %p153 = por %p151, %p152
      %p155 = scmp.ne.s32.totalorder %s138, %s154
      %p156 = scmp.eq.s32.totalorder %s23, 0
      %p157 = por %p155, %p156
      %p158 = scmp.le.s32.totalorder 1, %s17
      %p159 = scmp.lt.s32.totalorder %s17, 3
      %p160 = pnand %p158, %p159
      %p161 = pneg %p160
      // Predicated region
      $region9: #{_lambda_.1} parent=5 // pred_check
        _
      $region10: #{_lambda_.1} parent=5 // pred_check_branch
        %163 = sbr.rel (%p160) target = $region12
      $region11: #{_lambda_.1} parent=5 // pred_region
        %s164 = ssub.s32 %s17, 1
        // Predicated region
        $region13: #{_lambda_.1} parent=11 // pred_check
          %p165 = pneg %p62
        $region14: #{_lambda_.1} parent=11 // pred_check_branch
          %167 = sbr.rel (%p165) target = $region16
        $region15: #{_lambda_.1} parent=11 // pred_region
          %p168 = scmp.lt.s32.totalorder %s27, 0
          %s169 = scalar_select %p168, %s27, 0
          %s170 = smul.addr %s169, 8
          %s171 = scalar_lea.vmem %s1, %s170
        $region16: #{_lambda_.1} parent=11 // pred_fallthru
          _
      $region12: #{_lambda_.1} parent=5 // pred_fallthru
        _
      %p172 = scmp.lt.s32.totalorder %s17, 2
      // Predicated region
      $region17: #{_lambda_.1} parent=5 // pred_check
        %p173 = pneg %p172
      $region18: #{_lambda_.1} parent=5 // pred_check_branch
        %175 = sbr.rel (%p173) target = $region20
      $region19: #{_lambda_.1} parent=5 // pred_region
        // Predicated region
        $region21: #{_lambda_.1} parent=19 // pred_check
          %p176 = pneg %p92
        $region22: #{_lambda_.1} parent=19 // pred_check_branch
          %178 = sbr.rel (%p176) target = $region24
        $region23: #{_lambda_.1} parent=19 // pred_region
          %s179 = sld [smem:[#allocation5 + %s25]]
          %s180 = ssub.s32 %s179, 1
          %p181 = scmp.lt.s32.totalorder %s26, %s180
          %s182 = scalar_select %p181, %s26, %s180
          %s183 = smul.u32 16, %s182
          %p184 = scmp.lt.s32.totalorder %s25, 1
          %s185 = scalar_select %p184, %s25, 1
          %p186 = scmp.lt.s32.totalorder %s183, 15
          %s187 = scalar_select %p186, %s183, 15
          %s188 = smul.addr %s185, 16
          %s189 = sadd.s32 %s187, %s188
          %s190 = smul.addr %s189, 8
          %s191 = scalar_lea.vmem %s2, %s190
          %s192 = sld [smem:[#allocation5 + %s25]]
          %s193 = ssub.s32 %s192, 1
          %p194 = scmp.lt.s32.totalorder %s26, %s193
          %s195 = scalar_select %p194, %s26, %s193
          %s196 = smul.u32 16, %s195
        $region24: #{_lambda_.1} parent=19 // pred_fallthru
          _
        // Predicated region
        $region25: #{_lambda_.1} parent=19 // pred_check
          %p197 = pneg %p118
        $region26: #{_lambda_.1} parent=19 // pred_check_branch
          %199 = sbr.rel (%p197) target = $region28
        $region27: #{_lambda_.1} parent=19 // pred_region
          %p200 = scmp.lt.s32.totalorder %s25, 1
          %s201 = scalar_select %p200, %s25, 1
          %s202 = scalar_lea.vmem %s3, %s201
        $region28: #{_lambda_.1} parent=19 // pred_fallthru
          _
      $region20: #{_lambda_.1} parent=5 // pred_fallthru
        _
      %p203 = scmp.le.s32.totalorder 1, %s17
      %p204 = scmp.lt.s32.totalorder %s17, 3
      %p205 = pnand %p203, %p204
      %p206 = pneg %p205
      // Predicated region
      $region29: #{_lambda_.1} parent=5 // pred_check
        _
      $region30: #{_lambda_.1} parent=5 // pred_check_branch
        %208 = sbr.rel (%p205) target = $region32
      $region31: #{_lambda_.1} parent=5 // pred_region
        %s209 = ssub.s32 %s17, 1
        %p210 = scmp.lt.s32.totalorder %s27, 0
        %s211 = scalar_select %p210, %s27, 0
        %s212 = smul.addr %s211, 8
        %s213 = scalar_lea.vmem %s1, %s212
        %p214 = pneg %p62
        %p215 = pneg %p59
        %s216 = sld [smem:[#allocation5 + %s28]]
        %s217 = ssub.s32 %s216, 1
        %p218 = scmp.lt.s32.totalorder %s29, %s217
        %s219 = scalar_select %p218, %s29, %s217
        %s220 = smul.u32 16, %s219
        %p221 = scmp.lt.s32.totalorder %s28, 1
        %s222 = scalar_select %p221, %s28, 1
        %p223 = scmp.lt.s32.totalorder %s220, 15
        %s224 = scalar_select %p223, %s220, 15
        %s225 = smul.addr %s222, 16
        %s226 = sadd.s32 %s224, %s225
        %s227 = smul.addr %s226, 8
        %s228 = scalar_lea.vmem %s2, %s227
        %p229 = pneg %p98
        %p230 = pneg %p95
        %p231 = scmp.lt.s32.totalorder %s28, 1
        %s232 = scalar_select %p231, %s28, 1
        %s233 = scalar_lea.vmem %s3, %s232
        %p234 = pneg %p124
        %p235 = pneg %p121
        %p236 = pneg %p150
        %p237 = pneg %p147
        %p238 = scmp.lt.s32.totalorder %s27, 0
        %s239 = scalar_select %p238, %s27, 0
        %s240 = smul.addr %s239, 8
        %s241 = scalar_lea.vmem %s1, %s240
        %s242 = sld [smem:[#allocation5 + %s28]]
        %s243 = ssub.s32 %s242, 1
        %p244 = scmp.lt.s32.totalorder %s29, %s243
        %s245 = scalar_select %p244, %s29, %s243
        %s246 = smul.u32 16, %s245
        %p247 = scmp.lt.s32.totalorder %s28, 1
        %s248 = scalar_select %p247, %s28, 1
        %p249 = scmp.lt.s32.totalorder %s246, 15
        %s250 = scalar_select %p249, %s246, 15
        %s251 = smul.addr %s248, 16
        %s252 = sadd.s32 %s250, %s251
        %s253 = smul.addr %s252, 8
        %s254 = scalar_lea.vmem %s2, %s253
        %s255 = sld [smem:[#allocation5 + %s28]]
        %s256 = ssub.s32 %s255, 1
        %p257 = scmp.lt.s32.totalorder %s29, %s256
        %s258 = scalar_select %p257, %s29, %s256
        %s259 = smul.u32 16, %s258
        %p260 = scmp.lt.s32.totalorder %s28, 1
        %s261 = scalar_select %p260, %s28, 1
        %s262 = scalar_lea.vmem %s3, %s261
        %p263 = scmp.eq.s32.totalorder %s28, 0
        %p264 = scmp.eq.s32.totalorder %s29, 0
        %p265 = pnand %p263, %p264
        %p266 = pneg %p265
        // Predicated region
        $region33: #{_lambda_.1} parent=31 // pred_check
          _
        $region34: #{_lambda_.1} parent=31 // pred_check_branch
          %268 = sbr.rel (%p265) target = $region36
        $region35: #{_lambda_.1} parent=31 // pred_region
          %v269 = vld [vmem:[%s241] sm:$0xff]
          %270 = vst [vmem:[#allocation2] sm:$0xff] %v269
        $region36: #{_lambda_.1} parent=31 // pred_fallthru
          _
        // Predicated region
        $region37: #{_lambda_.1} parent=31 // pred_check
          %p271 = pneg %p264
        $region38: #{_lambda_.1} parent=31 // pred_check_branch
          %273 = sbr.rel (%p271) target = $region40
        $region39: #{_lambda_.1} parent=31 // pred_region
          %v274 = vld [vmem:[#allocation2] sm:$0xff]
          %v275 = vld [vmem:[%s254] sm:$0xff]
          %v276 = vld [vmem:[%s254 + $0x8] sm:$0xff]
          %v277 = vld [vmem:[%s254 + $0x10] sm:$0xff]
          %v278 = vld [vmem:[%s254 + $0x18] sm:$0xff]
          %v279 = vld [vmem:[%s254 + $0x20] sm:$0xff]
          %v280 = vld [vmem:[%s254 + $0x28] sm:$0xff]
          %v281 = vld [vmem:[%s254 + $0x30] sm:$0xff]
          %v282 = vld [vmem:[%s254 + $0x38] sm:$0xff]
          %v283 = vld [vmem:[%s254 + $0x40] sm:$0xff]
          %v284 = vld [vmem:[%s254 + $0x48] sm:$0xff]
          %v285 = vld [vmem:[%s254 + $0x50] sm:$0xff]
          %v286 = vld [vmem:[%s254 + $0x58] sm:$0xff]
          %v287 = vld [vmem:[%s254 + $0x60] sm:$0xff]
          %v288 = vld [vmem:[%s254 + $0x68] sm:$0xff]
          %v289 = vld [vmem:[%s254 + $0x70] sm:$0xff]
          %v290 = vld [vmem:[%s254 + $0x78] sm:$0xff]
          %291 = vmatprep.subr.mxu0 0.0
          %292 = vmatpush1.msra.mxu0 %v290
          %293 = vmatprep.subr.mxu0 0.0
          %294 = vmatpush1.msra.mxu0 %v289
          %295 = vmatprep.subr.mxu0 0.0
          %296 = vmatpush1.msra.mxu0 %v288
          %297 = vmatprep.subr.mxu0 0.0
          %298 = vmatpush1.msra.mxu0 %v287
          %299 = vmatprep.subr.mxu0 0.0
          %300 = vmatpush1.msra.mxu0 %v286
          %301 = vmatprep.subr.mxu0 0.0
          %302 = vmatpush1.msra.mxu0 %v285
          %303 = vmatprep.subr.mxu0 0.0
          %304 = vmatpush1.msra.mxu0 %v284
          %305 = vmatprep.subr.mxu0 0.0
          %306 = vmatpush1.msra.mxu0 %v283
          %307 = vmatprep.subr.mxu0 0.0
          %308 = vmatpush1.msra.mxu0 %v282
          %309 = vmatprep.subr.mxu0 0.0
          %310 = vmatpush1.msra.mxu0 %v281
          %311 = vmatprep.subr.mxu0 0.0
          %312 = vmatpush1.msra.mxu0 %v280
          %313 = vmatprep.subr.mxu0 0.0
          %314 = vmatpush1.msra.mxu0 %v279
          %315 = vmatprep.subr.mxu0 0.0
          %316 = vmatpush1.msra.mxu0 %v278
          %317 = vmatprep.subr.mxu0 0.0
          %318 = vmatpush1.msra.mxu0 %v277
          %319 = vmatprep.subr.mxu0 0.0
          %320 = vmatpush1.msra.mxu0 %v276
          %321 = vmatprep.subr.mxu0 0.0
          %322 = vmatpush1.msra.mxu0 %v275
          %323 = vmatprep.subr.mxu0 0.0
          %324 = vmatpush2.msra.mxu0 0.0
          %325 = vmatprep.subr.mxu0 0.0
          %326 = vmatpush2.msra.mxu0 0.0
          %327 = vmatprep.subr.mxu0 0.0
          %328 = vmatpush2.msra.mxu0 0.0
          %329 = vmatprep.subr.mxu0 0.0
          %330 = vmatpush2.msra.mxu0 0.0
          %331 = vmatprep.subr.mxu0 0.0
          %332 = vmatpush2.msra.mxu0 0.0
          %333 = vmatprep.subr.mxu0 0.0
          %334 = vmatpush2.msra.mxu0 0.0
          %335 = vmatprep.subr.mxu0 0.0
          %336 = vmatpush2.msra.mxu0 0.0
          %337 = vmatprep.subr.mxu0 0.0
          %338 = vmatpush2.msra.mxu0 0.0
          %339 = vmatprep.subr.mxu0 0.0
          %340 = vmatpush2.msra.mxu0 0.0
          %341 = vmatprep.subr.mxu0 0.0
          %342 = vmatpush2.msra.mxu0 0.0
          %343 = vmatprep.subr.mxu0 0.0
          %344 = vmatpush2.msra.mxu0 0.0
          %345 = vmatprep.subr.mxu0 0.0
          %346 = vmatpush2.msra.mxu0 0.0
          %347 = vmatprep.subr.mxu0 0.0
          %348 = vmatpush2.msra.mxu0 0.0
          %349 = vmatprep.subr.mxu0 0.0
          %350 = vmatpush2.msra.mxu0 0.0
          %351 = vmatprep.subr.mxu0 0.0
          %352 = vmatpush2.msra.mxu0 0.0
          %353 = vmatprep.subr.mxu0 0.0
          %354 = vmatpush2.msra.mxu0 0.0
          %355 = vmatprep.mubr.f32.mxu0 0.0
          %356 = vmatmul.mubr.f32.gmra.mxu0 %v274
          %v357 = vpop.f32.mrf.mxu0
          %v358 = vadd.f32 0.0, %v357
          %v359 = vpop.f32.mrf.mxu0
          %360 = vdwg.mxu0
          %361 = vst [vmem:[#allocation3] sm:$0xff] %v358
        $region40: #{_lambda_.1} parent=31 // pred_fallthru
          _
        %p362 = scmp.gt.s32.totalorder %s29, 0
        %s363 = sld [smem:[#allocation5 + %s28]]
        %p364 = scmp.lt.s32.totalorder %s29, %s363
        %p365 = pnand %p362, %p364
        %p366 = pneg %p365
        // Predicated region
        $region41: #{_lambda_.1} parent=31 // pred_check
          _
        $region42: #{_lambda_.1} parent=31 // pred_check_branch
          %368 = sbr.rel (%p365) target = $region44
        $region43: #{_lambda_.1} parent=31 // pred_region
          %v369 = vld [vmem:[#allocation3] sm:$0xff]
          %s370 = smul.u32 %s29, 8
          %s371 = scalar_lea.vmem [#allocation2], %s370
          %v372 = vld [vmem:[%s371] sm:$0xff]
          %v373 = vld [vmem:[%s254] sm:$0xff]
          %v374 = vld [vmem:[%s254 + $0x8] sm:$0xff]
          %v375 = vld [vmem:[%s254 + $0x10] sm:$0xff]
          %v376 = vld [vmem:[%s254 + $0x18] sm:$0xff]
          %v377 = vld [vmem:[%s254 + $0x20] sm:$0xff]
          %v378 = vld [vmem:[%s254 + $0x28] sm:$0xff]
          %v379 = vld [vmem:[%s254 + $0x30] sm:$0xff]
          %v380 = vld [vmem:[%s254 + $0x38] sm:$0xff]
          %v381 = vld [vmem:[%s254 + $0x40] sm:$0xff]
          %v382 = vld [vmem:[%s254 + $0x48] sm:$0xff]
          %v383 = vld [vmem:[%s254 + $0x50] sm:$0xff]
          %v384 = vld [vmem:[%s254 + $0x58] sm:$0xff]
          %v385 = vld [vmem:[%s254 + $0x60] sm:$0xff]
          %v386 = vld [vmem:[%s254 + $0x68] sm:$0xff]
          %v387 = vld [vmem:[%s254 + $0x70] sm:$0xff]
          %v388 = vld [vmem:[%s254 + $0x78] sm:$0xff]
          %389 = vmatprep.subr.mxu0 0.0
          %390 = vmatpush1.msra.mxu0 %v388
          %391 = vmatprep.subr.mxu0 0.0
          %392 = vmatpush1.msra.mxu0 %v387
          %393 = vmatprep.subr.mxu0 0.0
          %394 = vmatpush1.msra.mxu0 %v386
          %395 = vmatprep.subr.mxu0 0.0
          %396 = vmatpush1.msra.mxu0 %v385
          %397 = vmatprep.subr.mxu0 0.0
          %398 = vmatpush1.msra.mxu0 %v384
          %399 = vmatprep.subr.mxu0 0.0
          %400 = vmatpush1.msra.mxu0 %v383
          %401 = vmatprep.subr.mxu0 0.0
          %402 = vmatpush1.msra.mxu0 %v382
          %403 = vmatprep.subr.mxu0 0.0
          %404 = vmatpush1.msra.mxu0 %v381
          %405 = vmatprep.subr.mxu0 0.0
          %406 = vmatpush1.msra.mxu0 %v380
          %407 = vmatprep.subr.mxu0 0.0
          %408 = vmatpush1.msra.mxu0 %v379
          %409 = vmatprep.subr.mxu0 0.0
          %410 = vmatpush1.msra.mxu0 %v378
          %411 = vmatprep.subr.mxu0 0.0
          %412 = vmatpush1.msra.mxu0 %v377
          %413 = vmatprep.subr.mxu0 0.0
          %414 = vmatpush1.msra.mxu0 %v376
          %415 = vmatprep.subr.mxu0 0.0
          %416 = vmatpush1.msra.mxu0 %v375
          %417 = vmatprep.subr.mxu0 0.0
          %418 = vmatpush1.msra.mxu0 %v374
          %419 = vmatprep.subr.mxu0 0.0
          %420 = vmatpush1.msra.mxu0 %v373
          %421 = vmatprep.subr.mxu0 0.0
          %422 = vmatpush2.msra.mxu0 0.0
          %423 = vmatprep.subr.mxu0 0.0
          %424 = vmatpush2.msra.mxu0 0.0
          %425 = vmatprep.subr.mxu0 0.0
          %426 = vmatpush2.msra.mxu0 0.0
          %427 = vmatprep.subr.mxu0 0.0
          %428 = vmatpush2.msra.mxu0 0.0
          %429 = vmatprep.subr.mxu0 0.0
          %430 = vmatpush2.msra.mxu0 0.0
          %431 = vmatprep.subr.mxu0 0.0
          %432 = vmatpush2.msra.mxu0 0.0
          %433 = vmatprep.subr.mxu0 0.0
          %434 = vmatpush2.msra.mxu0 0.0
          %435 = vmatprep.subr.mxu0 0.0
          %436 = vmatpush2.msra.mxu0 0.0
          %437 = vmatprep.subr.mxu0 0.0
          %438 = vmatpush2.msra.mxu0 0.0
          %439 = vmatprep.subr.mxu0 0.0
          %440 = vmatpush2.msra.mxu0 0.0
          %441 = vmatprep.subr.mxu0 0.0
          %442 = vmatpush2.msra.mxu0 0.0
          %443 = vmatprep.subr.mxu0 0.0
          %444 = vmatpush2.msra.mxu0 0.0
          %445 = vmatprep.subr.mxu0 0.0
          %446 = vmatpush2.msra.mxu0 0.0
          %447 = vmatprep.subr.mxu0 0.0
          %448 = vmatpush2.msra.mxu0 0.0
          %449 = vmatprep.subr.mxu0 0.0
          %450 = vmatpush2.msra.mxu0 0.0
          %451 = vmatprep.subr.mxu0 0.0
          %452 = vmatpush2.msra.mxu0 0.0
          %453 = vmatprep.mubr.f32.mxu0 0.0
          %454 = vmatmul.mubr.f32.gmra.mxu0 %v372
          %v455 = vpop.f32.mrf.mxu0
          %v456 = vadd.f32 0.0, %v455
          %v457 = vpop.f32.mrf.mxu0
          %458 = vdwg.mxu0
          %v459 = vadd.f32 %v369, %v456
          %460 = vst [vmem:[#allocation3] sm:$0xff] %v459
        $region44: #{_lambda_.1} parent=31 // pred_fallthru
          _
        %p461 = scmp.lt.s32.totalorder %s28, 1
        %p462 = pnand %p264, %p461
        %p463 = pneg %p462
        // Predicated region
        $region45: #{_lambda_.1} parent=31 // pred_check
          _
        $region46: #{_lambda_.1} parent=31 // pred_check_branch
          %465 = sbr.rel (%p462) target = $region48
        $region47: #{_lambda_.1} parent=31 // pred_region
          %v466 = vld [vmem:[#allocation3] sm:$0xff]
          %v467 = vld [vmem:[%s262] sm:$0x1]
          %v469 = vlaneseq
          %v470 = vshrl.u32 %v469, 7
          %v471 = vsub.s32 0, %v470
          %v472 = vrot.slane %v467, %v471
          %v474 = vadd.f32 %v466, %v472
          %v475 = vmax.f32 %v474, 0.0
          %476 = vst [vmem:[#allocation2] sm:$0xff] %v475
        $region48: #{_lambda_.1} parent=31 // pred_fallthru
          _
        %p477 = scmp.eq.s32.totalorder %s28, 1
        %p478 = pnand %p264, %p477
        %p479 = pneg %p478
        // Predicated region
        $region49: #{_lambda_.1} parent=31 // pred_check
          _
        $region50: #{_lambda_.1} parent=31 // pred_check_branch
          %481 = sbr.rel (%p478) target = $region52
        $region51: #{_lambda_.1} parent=31 // pred_region
          %v482 = vld [vmem:[#allocation3] sm:$0xff]
          %v483 = vld [vmem:[%s262] sm:$0x1]
          %v485 = vlaneseq
          %v486 = vshrl.u32 %v485, 7
          %v487 = vsub.s32 0, %v486
          %v488 = vrot.slane %v483, %v487
          %v490 = vadd.f32 %v482, %v488
          %v491 = vmax.f32 %v490, 0.0
          %492 = vst [vmem:[#allocation6] sm:$0xff] %v491
        $region52: #{_lambda_.1} parent=31 // pred_fallthru
          _
        // Predicated region
        $region53: #{_lambda_.1} parent=31 // pred_check
          %p493 = pneg %p147
        $region54: #{_lambda_.1} parent=31 // pred_check_branch
          %495 = sbr.rel (%p493) target = $region56
        $region55: #{_lambda_.1} parent=31 // pred_region
          %s497 = ssub.s32 128, 128
          %498 = vsyncadd [#allocation7], %s497
          %s499 = smul.addr %s27, 128
          %s500 = scalar_lea.hbm %s4, %s499
          %s502 = sshll.u32 [#allocation6], 4
          %s503 = int_to_ptr.vmem [resolvable:$true] %s502
          %505 = dma.vmem_to_hbm [thread:$0]  %s503, 128, %s500, [#allocation7]
        $region56: #{_lambda_.1} parent=31 // pred_fallthru
          _
        // Predicated region
        $region57: #{_lambda_.1} parent=31 // pred_check
          %p506 = pneg %p147
        $region58: #{_lambda_.1} parent=31 // pred_check_branch
          %508 = sbr.rel (%p506) target = $region60
        $region59: #{_lambda_.1} parent=31 // pred_region
          %509 = dma.done [#allocation7], 128
        $region60: #{_lambda_.1} parent=31 // pred_fallthru
          _
      $region32: #{_lambda_.1} parent=5 // pred_fallthru
        _
      %p510 = scmp.le.s32.totalorder 2, %s17
      // Predicated region
      $region61: #{_lambda_.1} parent=5 // pred_check
        %p511 = pneg %p510
      $region62: #{_lambda_.1} parent=5 // pred_check_branch
        %513 = sbr.rel (%p511) target = $region64
      $region63: #{_lambda_.1} parent=5 // pred_region
        %s514 = ssub.s32 %s17, 2
      $region64: #{_lambda_.1} parent=5 // pred_fallthru
        _
    $region6: #{_lambda_.1} parent=1 // loop_footer
      %s21 = sadd.s32 1, %s17
    $region7: #{_lambda_.1} parent=1 // loop_footer_branch
      %16 = sbr.rel target = $region3
    $region8: #{_lambda_.1} parent=1 // loop_exit
      _
    %515 = vsyncpa [#allocation7], 1
    %s516 = scalar_lea.sflag [#allocation7], 1
    %517 = vsyncpa %s516, 1

</llo_original>
